<compile_context>
chip_gen: v7x
topology: tpu7x:2x2x1
jax: 0.10.0
libtpu: 0.0.40
codegen_flags: <defaults>
</compile_context>

<pallas_src>
import functools
import math

import jax
import jax.numpy as jnp
from jax.experimental import pallas as pl
from jax.experimental.pallas import tpu as pltpu


# --------------------------------------------------------------------------- #
# Kernels
# --------------------------------------------------------------------------- #
def _rmsnorm_kernel(x_ref, w_ref, o_ref, *, eps: float):
    # x_ref: (tile_rows, hidden), w_ref: (1, hidden) f32, o_ref: (tile_rows, hidden)
    x = x_ref[...].astype(jnp.float32)                  # f32 accumulation
    mean_sq = jnp.mean(x * x, axis=-1, keepdims=True)   # cross-lane reduce
    inv = jax.lax.rsqrt(mean_sq + eps)                  # EUP rsqrt
    o_ref[...] = (x * inv * w_ref[...]).astype(o_ref.dtype)


def _rmsnorm_folded_kernel(x_ref, w_ref, seg_ref, o_ref, *, eps: float, hidden: int):
    # x_ref: (tile_rows, k*hidden) -- k original rows folded onto the lane axis.
    # seg_ref: (k*hidden, k*hidden) 0/1 block-diagonal segment matrix.
    x = x_ref[...].astype(jnp.float32)
    x2 = x * x
    # Segmented lane sum on the MXU.  hi is bf16-exact and lo is tiny, so the
    # result is accurate to ~f32 even if the default f32 matmul uses bf16
    # passes; the MXU work hides under the (dominant) DMA time.
    hi = x2.astype(jnp.bfloat16).astype(jnp.float32)
    lo = x2 - hi
    seg = seg_ref[...]
    seg_sum = (jnp.dot(hi, seg, preferred_element_type=jnp.float32) +
               jnp.dot(lo, seg, preferred_element_type=jnp.float32))
    inv = jax.lax.rsqrt(seg_sum * (1.0 / hidden) + eps)
    o_ref[...] = (x * inv * w_ref[...]).astype(o_ref.dtype)


# --------------------------------------------------------------------------- #
# Wrapper helpers
# --------------------------------------------------------------------------- #
def _vmem_capacity_bytes() -> int:
    """Physical VMEM per core; conservative (v7x) fallback if query fails."""
    try:
        info = pltpu.get_tpu_info()
        cap = getattr(info, "vmem_capacity_bytes", None)
        if cap:
            return int(cap)
    except Exception:
        pass
    return 64 << 20


def _choose_tile_rows(rows: int, width: int, itemsize: int,
                      vmem_budget_bytes: int,
                      target_tile_bytes: int = 8 << 20,
                      max_tile_rows: int = 4096) -> int:
    """Pick tile_rows: ~8 MiB x-tile, multiple of 8, VMEM-budget aware,
    and guaranteeing >= 2 grid steps (v7x megacore) when rows allow it."""
    row_bytes = max(1, width * itemsize)
    # Double-buffered in + out tiles, plus the in-kernel f32 working set
    # (~2 f32 copies of the tile: upcast + temporaries).
    per_row_vmem = 4 * row_bytes + 2 * width * 4
    tr = min(target_tile_bytes // row_bytes,
             max(8, (vmem_budget_bytes - (4 << 20)) // per_row_vmem),
             max_tile_rows)
    tr = max(8, (int(tr) // 8) * 8)

    if rows <= 8:
        return rows                       # block == full rows dim (legal)
    rows_up = ((rows + 7) // 8) * 8
    tr = min(tr, rows_up)
    # v7x has 2 TensorCores: make sure the parallel rows axis has >= 2 steps.
    if pl.cdiv(rows, tr) < 2:
        tr = max(8, (((rows + 1) // 2) + 7) // 8 * 8)
    return tr


# --------------------------------------------------------------------------- #
# Public entry point
# --------------------------------------------------------------------------- #
def rmsnorm(x: jax.Array, weight: jax.Array, eps: float = 1e-6,
            tile_rows: int | None = None) -> jax.Array:
    """RMSNorm over the last axis, matching SimpleRMSNorm.forward semantics."""
    hidden = x.shape[-1]
    if weight.shape != (hidden,):
        raise ValueError(f"weight shape {weight.shape} != ({hidden},)")

    orig_shape = x.shape
    x2d = x.reshape(-1, hidden)
    rows = x2d.shape[0]
    itemsize = jnp.dtype(x.dtype).itemsize

    vmem_budget = (_vmem_capacity_bytes() * 3) // 4   # headroom for Mosaic scratch

    # ---- lane-density fold for narrow hidden ------------------------------
    fold = 1
    if rows > 0 and hidden % 128 != 0:
        k = 128 // math.gcd(hidden, 128)   # smallest k with (k*hidden) % 128 == 0
        if k > 1 and k * hidden <= 512 and rows % k == 0:
            fold = k
    # TODO(synk): when rows % k != 0 we fall back to the narrow (masked-store)
    # layout; padding rows to a multiple of k would keep stores lane-dense at
    # the cost of an extra HBM pass.

    if fold > 1:
        width = fold * hidden
        x2d = x2d.reshape(rows // fold, width)          # free row-major reshape
        w_row = jnp.tile(weight.astype(jnp.float32), fold).reshape(1, width)
        seg_ids = jnp.arange(width, dtype=jnp.int32) // hidden
        seg = (seg_ids[:, None] == seg_ids[None, :]).astype(jnp.float32)
        kernel = functools.partial(_rmsnorm_folded_kernel, eps=eps, hidden=hidden)
        extra_inputs = (seg,)
    else:
        width = hidden
        w_row = weight.astype(jnp.float32).reshape(1, width)
        kernel = functools.partial(_rmsnorm_kernel, eps=eps)
        extra_inputs = ()

    krows = x2d.shape[0]
    if tile_rows is None:
        tile_rows = _choose_tile_rows(krows, width, itemsize, vmem_budget)

    grid = (pl.cdiv(krows, tile_rows),)

    # VMEM accounting: double-buffered in/out tiles + in-kernel f32 working
    # set + resident weight / segment matrix + slack.
    tile_bytes = tile_rows * width * itemsize
    f32_work = 2 * tile_rows * width * 4
    seg_bytes = (width * width * 4) if fold > 1 else 0
    vmem_needed = 4 * tile_bytes + f32_work + 2 * width * 4 + 2 * seg_bytes + (2 << 20)
    vmem_limit = int(min(max(vmem_needed, 32 << 20), vmem_budget))

    cost = pl.CostEstimate(
        flops=3 * rows * hidden + (4 * krows * width * width if fold > 1 else 0),
        transcendentals=rows,                          # one rsqrt per row
        bytes_accessed=2 * rows * hidden * itemsize + hidden * 4 + seg_bytes,
    )

    in_specs = [
        pl.BlockSpec((tile_rows, width), lambda i: (i, 0)),
        pl.BlockSpec((1, width), lambda i: (0, 0)),
    ]
    if fold > 1:
        in_specs.append(pl.BlockSpec((width, width), lambda i: (0, 0)))

    out = pl.pallas_call(
        kernel,
        out_shape=jax.ShapeDtypeStruct((krows, width), x.dtype),
        grid_spec=pltpu.PrefetchScalarGridSpec(
            num_scalar_prefetch=0,
            grid=grid,
            in_specs=in_specs,
            out_specs=pl.BlockSpec((tile_rows, width), lambda i: (i, 0)),
        ),
        compiler_params=pltpu.CompilerParams(
            dimension_semantics=("parallel",),
            vmem_limit_bytes=vmem_limit,
        ),
        cost_estimate=cost,
    )(x2d, w_row, *extra_inputs)

    return out.reshape(orig_shape)


def rmsnorm_ref(x, weight, eps=1e-6):
    xf = x.astype(jnp.float32)
    var = jnp.mean(xf * xf, axis=-1, keepdims=True)
    return (weight * (xf * jax.lax.rsqrt(var + eps))).astype(x.dtype)


if __name__ == "__main__":
    key = jax.random.PRNGKey(0)
    batch, seq, hidden = 2, 8, 32

    x = jax.random.normal(key, (batch, seq, hidden), dtype=jnp.float32)
    # Deterministic parameter init matching nn.Parameter(torch.ones(hidden_size)).
    weight = jnp.ones((hidden,), dtype=jnp.float32)

    out = rmsnorm(x, weight, eps=1e-6)
    out = jax.block_until_ready(out)

    ref = rmsnorm_ref(x, weight, eps=1e-6)
    assert out.shape == x.shape, (out.shape, x.shape)
    assert jnp.allclose(out, ref, atol=1e-5, rtol=1e-5), "mismatch vs reference"

    print("KERNEL_OK")
</pallas_src>

<mosaic_0001>
module attributes {stable_mosaic.version = 11 : i64} {
  func.func @_rmsnorm_folded_kernel(%arg0: i32, %arg1: memref<4x128xf32, #tpu.memory_space<vmem>>, %arg2: memref<1x128xf32, #tpu.memory_space<vmem>>, %arg3: memref<128x128xf32, #tpu.memory_space<vmem>>, %arg4: memref<4x128xf32, #tpu.memory_space<vmem>>) attributes {dimension_semantics = [#tpu.dimension_semantics<parallel>], iteration_bounds = array<i64: 1>, scalar_prefetch = 0 : i64, scratch_operands = 0 : i64, tpu.core_type = #tpu.core_type<tc>, window_params = [{transform_indices = @transform_0, window_bounds = array<i64: 4, 128>}, {pipeline_mode = #tpu.pipeline_mode<synchronous>, transform_indices = @transform_1, window_bounds = array<i64: 1, 128>}, {pipeline_mode = #tpu.pipeline_mode<synchronous>, transform_indices = @transform_2, window_bounds = array<i64: 128, 128>}, {transform_indices = @transform_3, window_bounds = array<i64: 4, 128>}]} {
    %c0 = arith.constant 0 : index
    %c0_0 = arith.constant 0 : index
    %0 = vector.load %arg1[%c0, %c0_0] : memref<4x128xf32, #tpu.memory_space<vmem>>, vector<4x128xf32>
    %1 = arith.mulf %0, %0 : vector<4x128xf32>
    %2 = arith.truncf %1 : vector<4x128xf32> to vector<4x128xbf16>
    %3 = arith.extf %2 : vector<4x128xbf16> to vector<4x128xf32>
    %4 = arith.subf %1, %3 : vector<4x128xf32>
    %c0_1 = arith.constant 0 : index
    %c0_2 = arith.constant 0 : index
    %5 = vector.load %arg3[%c0_1, %c0_2] : memref<128x128xf32, #tpu.memory_space<vmem>>, vector<128x128xf32>
    %cst = arith.constant dense<0.000000e+00> : vector<4x128xf32>
    %6 = tpu.matmul %3, %5, %cst {dimension_numbers = #tpu.dot_dimension_numbers<[1], [0], [0], [1], [0, 0, 1, 1], [], []>} : vector<4x128xf32>, vector<128x128xf32>, vector<4x128xf32> -> vector<4x128xf32>
    %cst_3 = arith.constant dense<0.000000e+00> : vector<4x128xf32>
    %7 = tpu.matmul %4, %5, %cst_3 {dimension_numbers = #tpu.dot_dimension_numbers<[1], [0], [0], [1], [0, 0, 1, 1], [], []>} : vector<4x128xf32>, vector<128x128xf32>, vector<4x128xf32> -> vector<4x128xf32>
    %8 = arith.addf %6, %7 : vector<4x128xf32>
    %cst_4 = arith.constant 3.125000e-02 : f32
    %9 = vector.broadcast %cst_4 : f32 to vector<4x128xf32>
    %10 = arith.mulf %8, %9 : vector<4x128xf32>
    %cst_5 = arith.constant 9.99999997E-7 : f32
    %11 = vector.broadcast %cst_5 : f32 to vector<4x128xf32>
    %12 = arith.addf %10, %11 : vector<4x128xf32>
    %13 = math.rsqrt %12 : vector<4x128xf32>
    %14 = arith.mulf %0, %13 : vector<4x128xf32>
    %c0_6 = arith.constant 0 : index
    %c0_7 = arith.constant 0 : index
    %15 = vector.load %arg2[%c0_6, %c0_7] : memref<1x128xf32, #tpu.memory_space<vmem>>, vector<1x128xf32>
    %16 = vector.broadcast %15 : vector<1x128xf32> to vector<4x128xf32>
    %17 = arith.mulf %14, %16 : vector<4x128xf32>
    %c0_8 = arith.constant 0 : index
    %c0_9 = arith.constant 0 : index
    %18 = vector.load %arg4[%c0_8, %c0_9] : memref<4x128xf32, #tpu.memory_space<vmem>>, vector<4x128xf32>
    tpu.vector_store %arg4[%c0_8, %c0_9], %17 {strides = array<i32>} : memref<4x128xf32, #tpu.memory_space<vmem>>, vector<4x128xf32>,
    return
  }
  func.func @transform_0(%arg0: i32) -> (i32, i32) {
    %c0_i32 = arith.constant 0 : i32
    %c0_i32_0 = arith.constant 0 : i32
    return %arg0, %c0_i32 : i32, i32
  }
  func.func @transform_1(%arg0: i32) -> (i32, i32) {
    %c0_i32 = arith.constant 0 : i32
    %c0_i32_0 = arith.constant 0 : i32
    %c0_i32_1 = arith.constant 0 : i32
    return %c0_i32, %c0_i32_0 : i32, i32
  }
  func.func @transform_2(%arg0: i32) -> (i32, i32) {
    %c0_i32 = arith.constant 0 : i32
    %c0_i32_0 = arith.constant 0 : i32
    %c0_i32_1 = arith.constant 0 : i32
    return %c0_i32, %c0_i32_0 : i32, i32
  }
  func.func @transform_3(%arg0: i32) -> (i32, i32) {
    %c0_i32 = arith.constant 0 : i32
    %c0_i32_0 = arith.constant 0 : i32
    return %arg0, %c0_i32 : i32, i32
  }
}

</mosaic_0001>

<llo_original>
// kernel: tpu_custom_call.1
$region0: #{tpu_custom_call.1}
  #allocation0 [shape = 'u32[]', space=smem, size = 0x4, offset = 0x4, fixed_abs, tag = 'smem constant byte address 0x4 - core index']
  #allocation1 [shape = 'u32[144,128]{1,0:T(1,128)}', space=vmem, size = 0x12000, scoped, tag = 'internal scratch']
  %s0 = inlined_call_operand.hbm [shape: f32[4,128], index: 0, kind: input, shape index: {}]
  %s1 = inlined_call_operand.vmem [shape: f32[1,128], index: 1, kind: input, shape index: {}]
  %s2 = inlined_call_operand.hbm [shape: f32[128,128], index: 2, kind: input, shape index: {}]
  %s3 = inlined_call_operand.hbm [shape: f32[4,128], index: 3, kind: output, shape index: {}]
  %s4 = sld [smem:[#allocation0]]
  $region30: #{tpu_custom_call.1} parent=0
    _
  %s6 = ssub.s32 1, %s4
  %s7 = scalar_select 0, %s6, %s4
  $region1: #{tpu_custom_call.1} parent=0
    #allocation2 [shape = 'u8[2048]{0}', space=vmem, size = 0x800, scoped, tag = 'input window, operand 0, single buffered']
    #allocation3 [shape = 's32[1]{0}', space=sflag, size = 0x4, scoped, tag = 'scoped memory for tpu_custom_call.1']
    #allocation4 [shape = 's32[1]{0}', space=sflag, size = 0x4, scoped, tag = 'scoped memory for tpu_custom_call.1']
    #allocation5 [shape = 'u8[65536]{0}', space=vmem, size = 0x10000, scoped, tag = 'input window, operand 2, single buffered']
    #allocation6 [shape = 's32[1]{0}', space=sflag, size = 0x4, scoped, tag = 'scoped memory for tpu_custom_call.1']
    #allocation7 [shape = 'u8[2048]{0}', space=vmem, size = 0x800, scoped, tag = 'output window, operand 0, single buffered']
    %8 = vsyncpa [#allocation3], 0
    %9 = vsyncpa [#allocation6], 0
    %10 = vsyncpa [#allocation4], 0
    // Predicated region
    $region2: #{tpu_custom_call.1} parent=1 // pred_check
      _
    $region3: #{tpu_custom_call.1} parent=1 // pred_check_branch
      %12 = sbr.rel (0) target = $region5
    $region4: #{tpu_custom_call.1} parent=1 // pred_region
      %s14 = ssub.s32 64, 64
      %15 = vsyncadd [#allocation3], %s14
      %s17 = sshll.u32 [#allocation2], 4
      %s18 = int_to_ptr.vmem [resolvable:$true] %s17
      %20 = dma.hbm_to_vmem [thread:$0]  %s0, 64, %s18, [#allocation3]
    $region5: #{tpu_custom_call.1} parent=1 // pred_fallthru
      _
    // Predicated region
    $region6: #{tpu_custom_call.1} parent=1 // pred_check
      _
    $region7: #{tpu_custom_call.1} parent=1 // pred_check_branch
      %22 = sbr.rel (0) target = $region9
    $region8: #{tpu_custom_call.1} parent=1 // pred_region
      _
    $region9: #{tpu_custom_call.1} parent=1 // pred_fallthru
      _
    // Predicated region
    $region10: #{tpu_custom_call.1} parent=1 // pred_check
      _
    $region11: #{tpu_custom_call.1} parent=1 // pred_check_branch
      %24 = sbr.rel (0) target = $region13
    $region12: #{tpu_custom_call.1} parent=1 // pred_region
      %s26 = ssub.s32 2048, 2048
      %27 = vsyncadd [#allocation6], %s26
      %s28 = sshll.u32 [#allocation5], 4
      %s29 = int_to_ptr.vmem [resolvable:$true] %s28
      %34 = dma.hbm_to_vmem [thread:$0]  %s2, 2048, %s29, [#allocation6], 128, 128, 8
    $region13: #{tpu_custom_call.1} parent=1 // pred_fallthru
      _
    // Predicated region
    $region14: #{tpu_custom_call.1} parent=1 // pred_check
      _
    $region15: #{tpu_custom_call.1} parent=1 // pred_check_branch
      %36 = sbr.rel (0) target = $region17
    $region16: #{tpu_custom_call.1} parent=1 // pred_region
      %37 = dma.done [#allocation3], 64
    $region17: #{tpu_custom_call.1} parent=1 // pred_fallthru
      _
    // Predicated region
    $region18: #{tpu_custom_call.1} parent=1 // pred_check
      _
    $region19: #{tpu_custom_call.1} parent=1 // pred_check_branch
      %39 = sbr.rel (0) target = $region21
    $region20: #{tpu_custom_call.1} parent=1 // pred_region
      %40 = dma.done [#allocation6], 2048
    $region21: #{tpu_custom_call.1} parent=1 // pred_fallthru
      _
    %v41 = vld [vmem:[#allocation2] sm:$0xf]
    %v42 = vmul.f32 %v41, %v41
    %v43 = vpack.c.bf16 %v42, %v42
    %v44 = vunpack.c.l.bf16 %v43
    %v45 = vsub.f32 %v42, %v44
    %v46 = vld [vmem:[#allocation5] sm:$0xff]
    %v47 = vld [vmem:[#allocation5 + $0x8] sm:$0xff]
    %v48 = vld [vmem:[#allocation5 + $0x10] sm:$0xff]
    %v49 = vld [vmem:[#allocation5 + $0x18] sm:$0xff]
    %v50 = vld [vmem:[#allocation5 + $0x20] sm:$0xff]
    %v51 = vld [vmem:[#allocation5 + $0x28] sm:$0xff]
    %v52 = vld [vmem:[#allocation5 + $0x30] sm:$0xff]
    %v53 = vld [vmem:[#allocation5 + $0x38] sm:$0xff]
    %v54 = vld [vmem:[#allocation5 + $0x40] sm:$0xff]
    %v55 = vld [vmem:[#allocation5 + $0x48] sm:$0xff]
    %v56 = vld [vmem:[#allocation5 + $0x50] sm:$0xff]
    %v57 = vld [vmem:[#allocation5 + $0x58] sm:$0xff]
    %v58 = vld [vmem:[#allocation5 + $0x60] sm:$0xff]
    %v59 = vld [vmem:[#allocation5 + $0x68] sm:$0xff]
    %v60 = vld [vmem:[#allocation5 + $0x70] sm:$0xff]
    %v61 = vld [vmem:[#allocation5 + $0x78] sm:$0xff]
    %62 = vmatprep.subr.mxu0 0.0
    %63 = vmatpush1.msra.mxu0 %v46
    %64 = vmatprep.subr.mxu0 0.0
    %65 = vmatpush1.msra.mxu0 %v47
    %66 = vmatprep.subr.mxu0 0.0
    %67 = vmatpush1.msra.mxu0 %v48
    %68 = vmatprep.subr.mxu0 0.0
    %69 = vmatpush1.msra.mxu0 %v49
    %70 = vmatprep.subr.mxu0 0.0
    %71 = vmatpush1.msra.mxu0 %v50
    %72 = vmatprep.subr.mxu0 0.0
    %73 = vmatpush1.msra.mxu0 %v51
    %74 = vmatprep.subr.mxu0 0.0
    %75 = vmatpush1.msra.mxu0 %v52
    %76 = vmatprep.subr.mxu0 0.0
    %77 = vmatpush1.msra.mxu0 %v53
    %78 = vmatprep.subr.mxu0 0.0
    %79 = vmatpush1.msra.mxu0 %v54
    %80 = vmatprep.subr.mxu0 0.0
    %81 = vmatpush1.msra.mxu0 %v55
    %82 = vmatprep.subr.mxu0 0.0
    %83 = vmatpush1.msra.mxu0 %v56
    %84 = vmatprep.subr.mxu0 0.0
    %85 = vmatpush1.msra.mxu0 %v57
    %86 = vmatprep.subr.mxu0 0.0
    %87 = vmatpush1.msra.mxu0 %v58
    %88 = vmatprep.subr.mxu0 0.0
    %89 = vmatpush1.msra.mxu0 %v59
    %90 = vmatprep.subr.mxu0 0.0
    %91 = vmatpush1.msra.mxu0 %v60
    %92 = vmatprep.subr.mxu0 0.0
    %93 = vmatpush1.msra.mxu0 %v61
    %94 = vmatprep.subr.mxu0 0.0
    %95 = vmatpush1.msra.mxu0 0.0
    %96 = vmatprep.subr.mxu0 0.0
    %97 = vmatpush1.msra.mxu0 0.0
    %98 = vmatprep.subr.mxu0 0.0
    %99 = vmatpush1.msra.mxu0 0.0
    %100 = vmatprep.subr.mxu0 0.0
    %101 = vmatpush1.msra.mxu0 0.0
    %102 = vmatprep.subr.mxu0 0.0
    %103 = vmatpush1.msra.mxu0 0.0
    %104 = vmatprep.subr.mxu0 0.0
    %105 = vmatpush1.msra.mxu0 0.0
    %106 = vmatprep.subr.mxu0 0.0
    %107 = vmatpush1.msra.mxu0 0.0
    %108 = vmatprep.subr.mxu0 0.0
    %109 = vmatpush1.msra.mxu0 0.0
    %110 = vmatprep.subr.mxu0 0.0
    %111 = vmatpush1.msra.mxu0 0.0
    %112 = vmatprep.subr.mxu0 0.0
    %113 = vmatpush1.msra.mxu0 0.0
    %114 = vmatprep.subr.mxu0 0.0
    %115 = vmatpush1.msra.mxu0 0.0
    %116 = vmatprep.subr.mxu0 0.0
    %117 = vmatpush1.msra.mxu0 0.0
    %118 = vmatprep.subr.mxu0 0.0
    %119 = vmatpush1.msra.mxu0 0.0
    %120 = vmatprep.subr.mxu0 0.0
    %121 = vmatpush1.msra.mxu0 0.0
    %122 = vmatprep.subr.mxu0 0.0
    %123 = vmatpush1.msra.mxu0 0.0
    %124 = vmatprep.subr.mxu0 0.0
    %125 = vmatpush1.msra.mxu0 0.0
    %126 = vmatprep.mubr.f32.mxu0 0.0
    %127 = vmatmul.mubr.f32.gmra.mrb[0].mxu0 %v45
    %v128 = vpop.f32.mrb[0].mxu0
    %v129 = vadd.f32 0.0, %v128
    %v130 = vpop.f32.mrb[0].mxu0
    %131 = vdwg.mxu0
    %132 = vmatprep.subr.mxu0 0.0
    %133 = vmatpush1.msra.mxu0 %v46
    %134 = vmatprep.subr.mxu0 0.0
    %135 = vmatpush1.msra.mxu0 %v47
    %136 = vmatprep.subr.mxu0 0.0
    %137 = vmatpush1.msra.mxu0 %v48
    %138 = vmatprep.subr.mxu0 0.0
    %139 = vmatpush1.msra.mxu0 %v49
    %140 = vmatprep.subr.mxu0 0.0
    %141 = vmatpush1.msra.mxu0 %v50
    %142 = vmatprep.subr.mxu0 0.0
    %143 = vmatpush1.msra.mxu0 %v51
    %144 = vmatprep.subr.mxu0 0.0
    %145 = vmatpush1.msra.mxu0 %v52
    %146 = vmatprep.subr.mxu0 0.0
    %147 = vmatpush1.msra.mxu0 %v53
    %148 = vmatprep.subr.mxu0 0.0
    %149 = vmatpush1.msra.mxu0 %v54
    %150 = vmatprep.subr.mxu0 0.0
    %151 = vmatpush1.msra.mxu0 %v55
    %152 = vmatprep.subr.mxu0 0.0
    %153 = vmatpush1.msra.mxu0 %v56
    %154 = vmatprep.subr.mxu0 0.0
    %155 = vmatpush1.msra.mxu0 %v57
    %156 = vmatprep.subr.mxu0 0.0
    %157 = vmatpush1.msra.mxu0 %v58
    %158 = vmatprep.subr.mxu0 0.0
    %159 = vmatpush1.msra.mxu0 %v59
    %160 = vmatprep.subr.mxu0 0.0
    %161 = vmatpush1.msra.mxu0 %v60
    %162 = vmatprep.subr.mxu0 0.0
    %163 = vmatpush1.msra.mxu0 %v61
    %164 = vmatprep.subr.mxu0 0.0
    %165 = vmatpush1.msra.mxu0 0.0
    %166 = vmatprep.subr.mxu0 0.0
    %167 = vmatpush1.msra.mxu0 0.0
    %168 = vmatprep.subr.mxu0 0.0
    %169 = vmatpush1.msra.mxu0 0.0
    %170 = vmatprep.subr.mxu0 0.0
    %171 = vmatpush1.msra.mxu0 0.0
    %172 = vmatprep.subr.mxu0 0.0
    %173 = vmatpush1.msra.mxu0 0.0
    %174 = vmatprep.subr.mxu0 0.0
    %175 = vmatpush1.msra.mxu0 0.0
    %176 = vmatprep.subr.mxu0 0.0
    %177 = vmatpush1.msra.mxu0 0.0
    %178 = vmatprep.subr.mxu0 0.0
    %179 = vmatpush1.msra.mxu0 0.0
    %180 = vmatprep.subr.mxu0 0.0
    %181 = vmatpush1.msra.mxu0 0.0
    %182 = vmatprep.subr.mxu0 0.0
    %183 = vmatpush1.msra.mxu0 0.0
    %184 = vmatprep.subr.mxu0 0.0
    %185 = vmatpush1.msra.mxu0 0.0
    %186 = vmatprep.subr.mxu0 0.0
    %187 = vmatpush1.msra.mxu0 0.0
    %188 = vmatprep.subr.mxu0 0.0
    %189 = vmatpush1.msra.mxu0 0.0
    %190 = vmatprep.subr.mxu0 0.0
    %191 = vmatpush1.msra.mxu0 0.0
    %192 = vmatprep.subr.mxu0 0.0
    %193 = vmatpush1.msra.mxu0 0.0
    %194 = vmatprep.subr.mxu0 0.0
    %195 = vmatpush1.msra.mxu0 0.0
    %196 = vmatprep.mubr.f32.mxu0 0.0
    %197 = vmatmul.mubr.f32.gmra.mrb[0].mxu0 %v44
    %v198 = vpop.f32.mrb[0].mxu0
    %v199 = vadd.f32 %v129, %v198
    %v200 = vpop.f32.mrb[0].mxu0
    %201 = vdwg.mxu0
    %v202 = vmul.f32 %v199, 0.03125
    %v203 = vadd.f32 %v202, 1e-06
    %v204 = vrsqrt.pop %v203
    %v205 = vmul.f32 %v41, %v204
    %v206 = vld [vmem:[%s1] sm:$0x1]
    %v208 = vlaneseq
    %v209 = vshrl.u32 %v208, 7
    %v210 = vsub.s32 0, %v209
    %v211 = vrot.slane %v206, %v210
    %v213 = vmul.f32 %v205, %v211
    %214 = vst [vmem:[#allocation7] sm:$0xf] %v213
    // Predicated region
    $region22: #{tpu_custom_call.1} parent=1 // pred_check
      _
    $region23: #{tpu_custom_call.1} parent=1 // pred_check_branch
      %216 = sbr.rel (0) target = $region25
    $region24: #{tpu_custom_call.1} parent=1 // pred_region
      %s218 = ssub.s32 64, 64
      %219 = vsyncadd [#allocation4], %s218
      %s221 = sshll.u32 [#allocation7], 4
      %s222 = int_to_ptr.vmem [resolvable:$true] %s221
      %224 = dma.vmem_to_hbm [thread:$0]  %s222, 64, %s3, [#allocation4]
    $region25: #{tpu_custom_call.1} parent=1 // pred_fallthru
      _
    // Predicated region
    $region26: #{tpu_custom_call.1} parent=1 // pred_check
      _
    $region27: #{tpu_custom_call.1} parent=1 // pred_check_branch
      %226 = sbr.rel (0) target = $region29
    $region28: #{tpu_custom_call.1} parent=1 // pred_region
      %227 = dma.done [#allocation4], 64
    $region29: #{tpu_custom_call.1} parent=1 // pred_fallthru
      _
    %228 = vsyncpa [#allocation3], 1
    %229 = vsyncpa [#allocation6], 1
    %230 = vsyncpa [#allocation4], 1

</llo_original>
